<compile_context>
chip_gen: v7x
topology: tpu7x:2x2x1
jax: 0.10.0
libtpu: 0.0.40
codegen_flags: <defaults>
</compile_context>

<pallas_src>
import jax
import jax.numpy as jnp
from jax.experimental import pallas as pl
from jax.experimental.pallas import tpu as pltpu

_LANE = 128
_SUBLANE = 8


def _round_up(x, m):
    return ((x + m - 1) // m) * m


def _padded_tile_bytes(shape, itemsize=4):
    """f32 VMEM bytes of a tile after (8, 128) layout padding."""
    if len(shape) == 1:
        shape = (1, shape[0])
    lead = 1
    for d in shape[:-2]:
        lead *= int(d)
    r, c = int(shape[-2]), int(shape[-1])
    return lead * _round_up(r, _SUBLANE) * _round_up(c, _LANE) * itemsize


def _make_critic_kernel(num_linear_layers):
    """Builds a fused kernel for the whole MLP (layer count fixed at trace time).

    Kernel ref order:
      x_ref, w0, b0, w1, b1, ..., w_{n-1}, b_{n-1}, out_ref
    All weights are pre-transposed to [in, out]; biases are [1, out]; all f32.
    """
    n = num_linear_layers

    def kernel(x_ref, *refs):
        out_ref = refs[-1]
        params = refs[:-1]

        h = x_ref[...].astype(jnp.float32)
        for i in range(n):
            w = params[2 * i][...]          # [in, out] (pre-transposed)
            b = params[2 * i + 1][...]      # [1, out]
            h = jnp.dot(h, w, preferred_element_type=jnp.float32) + b
            # nn.Sequential structure: ReLU only follows Linear_1 .. Linear_{n-2}
            # (no activation after Linear_0, none after the final Linear).
            if 1 <= i <= n - 2:
                h = jnp.maximum(h, 0.0)

        out_ref[...] = h.astype(out_ref.dtype)

    return kernel


def critic_forward(state, action, weights, biases, *, block_batch=512):
    """Runs the fused, batch-tiled Pallas critic kernel.

    state:  [B, state_dim]  float32
    action: [B, action_dim] float32
    weights[i]: [out_i, in_i] (PyTorch layout), biases[i]: [out_i]
    returns: [B, 1] float32
    """
    n = len(weights)
    assert n >= 2 and len(biases) == n
    B, sd = state.shape
    ad = action.shape[1]
    assert action.shape[0] == B

    # --- host-side (one-time) prep: concat inputs, pre-transpose parameters ---
    x = jnp.concatenate(
        [jnp.asarray(state, jnp.float32), jnp.asarray(action, jnp.float32)], axis=1)
    params = []
    for w, b in zip(weights, biases):
        params.append(jnp.asarray(w, jnp.float32).T)               # [in, out]
        params.append(jnp.asarray(b, jnp.float32).reshape(1, -1))  # [1, out]

    in_dim = sd + ad
    act_widths = [in_dim] + [int(w.shape[0]) for w in weights]

    # --- batch tile: multiple of 8, >= 2 grid steps when possible, VMEM-bounded ---
    TB = _round_up(max(8, int(block_batch)), _SUBLANE)
    # Cap TB at ~half the (rounded) batch so grid >= 2 -> both v7x TCs get work.
    half = _round_up(max(8, (B + 1) // 2), _SUBLANE)
    TB = min(TB, half)

    def footprint(tb):
        fb = 2 * _padded_tile_bytes((tb, in_dim))        # streamed input (2 bufs)
        fb += 2 * _padded_tile_bytes((tb, 1))            # streamed output (2 bufs)
        fb += sum(2 * _padded_tile_bytes(p.shape) for p in params)  # resident params
        fb += 2 * _padded_tile_bytes((tb, max(act_widths)))         # live activations
        return fb

    VMEM_BUDGET = 40 << 20   # stay comfortably under v7x's 64 MiB physical VMEM
    while TB > 8 and footprint(TB) > VMEM_BUDGET:
        TB = _round_up(TB // 2, _SUBLANE)

    B_pad = _round_up(B, TB)
    if B_pad != B:
        x = jnp.pad(x, ((0, B_pad - B), (0, 0)))
    grid = (B_pad // TB,)

    in_specs = [pl.BlockSpec((TB, in_dim), lambda i: (i, 0))]       # streamed per tile
    for p in params:
        # Full-array block + constant index -> DMA'd once, VMEM-resident.
        in_specs.append(pl.BlockSpec(p.shape, lambda i: (0, 0)))
    out_spec = pl.BlockSpec((TB, 1), lambda i: (i, 0))

    vmem_limit = int(min(max(footprint(TB) + (4 << 20), 16 << 20), 48 << 20))
    compiler_params = pltpu.CompilerParams(
        # Batch axis is embarrassingly parallel: shards across v7x's 2 TensorCores,
        # harmless on single-TC v5e/v6e.
        dimension_semantics=("parallel",),
        vmem_limit_bytes=vmem_limit,
    )

    out = pl.pallas_call(
        _make_critic_kernel(n),
        out_shape=jax.ShapeDtypeStruct((B_pad, 1), jnp.float32),
        grid=grid,
        in_specs=in_specs,
        out_specs=out_spec,
        compiler_params=compiler_params,
    )(x, *params)
    # Zero-padded batch rows produce bias-propagated garbage; slice them off here.
    return out[:B]


def init_critic_params(key, state_dim, action_dim, hide_n2, hide_list2):
    """Deterministic PyTorch-style init: U(-1/sqrt(fan_in), 1/sqrt(fan_in))."""
    assert hide_n2 == len(hide_list2)
    dims_in = [state_dim + action_dim] + list(hide_list2)
    dims_out = list(hide_list2) + [1]

    weights, biases = [], []
    for din, dout in zip(dims_in, dims_out):
        key, kw, kb = jax.random.split(key, 3)
        bound = 1.0 / jnp.sqrt(jnp.float32(din))
        w = jax.random.uniform(kw, (dout, din), jnp.float32, -bound, bound)
        b = jax.random.uniform(kb, (dout,), jnp.float32, -bound, bound)
        weights.append(w)
        biases.append(b)
    return weights, biases


def critic_reference(state, action, weights, biases):
    """Pure-JAX reference mirroring the nn.Sequential structure."""
    x = jnp.concatenate([state, action], axis=1)
    n = len(weights)
    for i in range(n):
        x = x @ weights[i].T + biases[i]
        if 1 <= i <= n - 2:
            x = jnp.maximum(x, 0.0)
    return x


if __name__ == "__main__":
    # Small shapes consistent with the module's forward.
    batch = 8
    state_dim = 12
    action_dim = 4
    hide_n2 = 2
    hide_list2 = [32, 32]

    key = jax.random.PRNGKey(0)
    key, ks, ka, kp = jax.random.split(key, 4)
    state = jax.random.normal(ks, (batch, state_dim), jnp.float32)
    action = jax.random.normal(ka, (batch, action_dim), jnp.float32)
    weights, biases = init_critic_params(kp, state_dim, action_dim, hide_n2, hide_list2)

    q = jax.block_until_ready(critic_forward(state, action, weights, biases))
    q_ref = critic_reference(state, action, weights, biases)
    assert q.shape == (batch, 1)
    assert jnp.allclose(q, q_ref, atol=1e-4, rtol=1e-4), "mismatch vs reference (small batch)"

    # Larger, non-divisible batch: exercises padding and a >= 2-step "parallel" grid
    # (the v7x two-TensorCore sharding path).
    key, ks2, ka2 = jax.random.split(key, 3)
    batch2 = 300
    state2 = jax.random.normal(ks2, (batch2, state_dim), jnp.float32)
    action2 = jax.random.normal(ka2, (batch2, action_dim), jnp.float32)
    q2 = jax.block_until_ready(critic_forward(state2, action2, weights, biases))
    q2_ref = critic_reference(state2, action2, weights, biases)
    assert q2.shape == (batch2, 1)
    assert jnp.allclose(q2, q2_ref, atol=1e-4, rtol=1e-4), "mismatch vs reference (tiled batch)"

    print("KERNEL_OK")
</pallas_src>

<mosaic_0001>
module attributes {stable_mosaic.version = 11 : i64} {
  func.func @kernel(%arg0: i32, %arg1: memref<8x16xf32, #tpu.memory_space<vmem>>, %arg2: memref<16x32xf32, #tpu.memory_space<vmem>>, %arg3: memref<1x32xf32, #tpu.memory_space<vmem>>, %arg4: memref<32x32xf32, #tpu.memory_space<vmem>>, %arg5: memref<1x32xf32, #tpu.memory_space<vmem>>, %arg6: memref<32x1xf32, #tpu.memory_space<vmem>>, %arg7: memref<1x1xf32, #tpu.memory_space<vmem>>, %arg8: memref<8x1xf32, #tpu.memory_space<vmem>>) attributes {dimension_semantics = [#tpu.dimension_semantics<parallel>], iteration_bounds = array<i64: 1>, scalar_prefetch = 0 : i64, scratch_operands = 0 : i64, tpu.core_type = #tpu.core_type<tc>, window_params = [{transform_indices = @transform_0, window_bounds = array<i64: 8, 16>}, {pipeline_mode = #tpu.pipeline_mode<synchronous>, transform_indices = @transform_1, window_bounds = array<i64: 16, 32>}, {pipeline_mode = #tpu.pipeline_mode<synchronous>, transform_indices = @transform_2, window_bounds = array<i64: 1, 32>}, {pipeline_mode = #tpu.pipeline_mode<synchronous>, transform_indices = @transform_3, window_bounds = array<i64: 32, 32>}, {pipeline_mode = #tpu.pipeline_mode<synchronous>, transform_indices = @transform_4, window_bounds = array<i64: 1, 32>}, {pipeline_mode = #tpu.pipeline_mode<synchronous>, transform_indices = @transform_5, window_bounds = array<i64: 32, 1>}, {pipeline_mode = #tpu.pipeline_mode<synchronous>, transform_indices = @transform_6, window_bounds = array<i64: 1, 1>}, {transform_indices = @transform_7, window_bounds = array<i64: 8, 1>}]} {
    %c0 = arith.constant 0 : index
    %c0_0 = arith.constant 0 : index
    %0 = vector.load %arg1[%c0, %c0_0] : memref<8x16xf32, #tpu.memory_space<vmem>>, vector<8x16xf32>
    %c0_1 = arith.constant 0 : index
    %c0_2 = arith.constant 0 : index
    %1 = vector.load %arg2[%c0_1, %c0_2] : memref<16x32xf32, #tpu.memory_space<vmem>>, vector<16x32xf32>
    %c0_3 = arith.constant 0 : index
    %c0_4 = arith.constant 0 : index
    %2 = vector.load %arg3[%c0_3, %c0_4] : memref<1x32xf32, #tpu.memory_space<vmem>>, vector<1x32xf32>
    %cst = arith.constant dense<0.000000e+00> : vector<8x32xf32>
    %3 = tpu.matmul %0, %1, %cst {dimension_numbers = #tpu.dot_dimension_numbers<[1], [0], [0], [1], [0, 0, 1, 1], [], []>} : vector<8x16xf32>, vector<16x32xf32>, vector<8x32xf32> -> vector<8x32xf32>
    %4 = vector.broadcast %2 : vector<1x32xf32> to vector<8x32xf32>
    %5 = arith.addf %3, %4 : vector<8x32xf32>
    %c0_5 = arith.constant 0 : index
    %c0_6 = arith.constant 0 : index
    %6 = vector.load %arg4[%c0_5, %c0_6] : memref<32x32xf32, #tpu.memory_space<vmem>>, vector<32x32xf32>
    %c0_7 = arith.constant 0 : index
    %c0_8 = arith.constant 0 : index
    %7 = vector.load %arg5[%c0_7, %c0_8] : memref<1x32xf32, #tpu.memory_space<vmem>>, vector<1x32xf32>
    %cst_9 = arith.constant dense<0.000000e+00> : vector<8x32xf32>
    %8 = tpu.matmul %5, %6, %cst_9 {dimension_numbers = #tpu.dot_dimension_numbers<[1], [0], [0], [1], [0, 0, 1, 1], [], []>} : vector<8x32xf32>, vector<32x32xf32>, vector<8x32xf32> -> vector<8x32xf32>
    %9 = vector.broadcast %7 : vector<1x32xf32> to vector<8x32xf32>
    %10 = arith.addf %8, %9 : vector<8x32xf32>
    %cst_10 = arith.constant 0.000000e+00 : f32
    %11 = vector.broadcast %cst_10 : f32 to vector<8x32xf32>
    %12 = arith.maximumf %10, %11 : vector<8x32xf32>
    %c0_11 = arith.constant 0 : index
    %c0_12 = arith.constant 0 : index
    %13 = vector.load %arg6[%c0_11, %c0_12] : memref<32x1xf32, #tpu.memory_space<vmem>>, vector<32x1xf32>
    %c0_13 = arith.constant 0 : index
    %c0_14 = arith.constant 0 : index
    %14 = vector.load %arg7[%c0_13, %c0_14] : memref<1x1xf32, #tpu.memory_space<vmem>>, vector<1x1xf32>
    %cst_15 = arith.constant dense<0.000000e+00> : vector<8x1xf32>
    %15 = tpu.matmul %12, %13, %cst_15 {dimension_numbers = #tpu.dot_dimension_numbers<[1], [0], [0], [1], [0, 0, 1, 1], [], []>} : vector<8x32xf32>, vector<32x1xf32>, vector<8x1xf32> -> vector<8x1xf32>
    %16 = vector.broadcast %14 : vector<1x1xf32> to vector<8x1xf32>
    %17 = arith.addf %15, %16 : vector<8x1xf32>
    %c0_16 = arith.constant 0 : index
    %c0_17 = arith.constant 0 : index
    %18 = vector.load %arg8[%c0_16, %c0_17] : memref<8x1xf32, #tpu.memory_space<vmem>>, vector<8x1xf32>
    tpu.vector_store %arg8[%c0_16, %c0_17], %17 {strides = array<i32>} : memref<8x1xf32, #tpu.memory_space<vmem>>, vector<8x1xf32>,
    return
  }
  func.func @transform_0(%arg0: i32) -> (i32, i32) {
    %c0_i32 = arith.constant 0 : i32
    %c0_i32_0 = arith.constant 0 : i32
    return %arg0, %c0_i32 : i32, i32
  }
  func.func @transform_1(%arg0: i32) -> (i32, i32) {
    %c0_i32 = arith.constant 0 : i32
    %c0_i32_0 = arith.constant 0 : i32
    %c0_i32_1 = arith.constant 0 : i32
    return %c0_i32, %c0_i32_0 : i32, i32
  }
  func.func @transform_2(%arg0: i32) -> (i32, i32) {
    %c0_i32 = arith.constant 0 : i32
    %c0_i32_0 = arith.constant 0 : i32
    %c0_i32_1 = arith.constant 0 : i32
    return %c0_i32, %c0_i32_0 : i32, i32
  }
  func.func @transform_3(%arg0: i32) -> (i32, i32) {
    %c0_i32 = arith.constant 0 : i32
    %c0_i32_0 = arith.constant 0 : i32
    %c0_i32_1 = arith.constant 0 : i32
    return %c0_i32, %c0_i32_0 : i32, i32
  }
  func.func @transform_4(%arg0: i32) -> (i32, i32) {
    %c0_i32 = arith.constant 0 : i32
    %c0_i32_0 = arith.constant 0 : i32
    %c0_i32_1 = arith.constant 0 : i32
    return %c0_i32, %c0_i32_0 : i32, i32
  }
  func.func @transform_5(%arg0: i32) -> (i32, i32) {
    %c0_i32 = arith.constant 0 : i32
    %c0_i32_0 = arith.constant 0 : i32
    %c0_i32_1 = arith.constant 0 : i32
    return %c0_i32, %c0_i32_0 : i32, i32
  }
  func.func @transform_6(%arg0: i32) -> (i32, i32) {
    %c0_i32 = arith.constant 0 : i32
    %c0_i32_0 = arith.constant 0 : i32
    %c0_i32_1 = arith.constant 0 : i32
    return %c0_i32, %c0_i32_0 : i32, i32
  }
  func.func @transform_7(%arg0: i32) -> (i32, i32) {
    %c0_i32 = arith.constant 0 : i32
    %c0_i32_0 = arith.constant 0 : i32
    return %arg0, %c0_i32 : i32, i32
  }
}

</mosaic_0001>

<llo_original>
// kernel: tpu_custom_call.1
$region0: #{tpu_custom_call.1}
  #allocation0 [shape = 'u32[]', space=smem, size = 0x4, offset = 0x4, fixed_abs, tag = 'smem constant byte address 0x4 - core index']
  #allocation1 [shape = 'u32[144,128]{1,0:T(1,128)}', space=vmem, size = 0x12000, scoped, tag = 'internal scratch']
  #allocation2 [shape = 'f32[1,1]{1,0:T(1,128)S(1)}', space=vmem, size = 0x200, scoped, tag = 'scoped memory for tpu_custom_call.1']
  %s0 = inlined_call_operand.hbm [shape: f32[8,16], index: 0, kind: input, shape index: {}]
  %s1 = inlined_call_operand.vmem [shape: f32[16,32], index: 1, kind: input, shape index: {}]
  %s2 = inlined_call_operand.hbm [shape: f32[1,32], index: 2, kind: input, shape index: {}]
  %s3 = inlined_call_operand.vmem [shape: f32[32,32], index: 3, kind: input, shape index: {}]
  %s4 = inlined_call_operand.vmem [shape: f32[1,32], index: 4, kind: input, shape index: {}]
  %s5 = inlined_call_operand.vmem [shape: f32[32,1], index: 5, kind: input, shape index: {}]
  %s6 = inlined_call_operand.<no memory space> [shape: f32[1,1], index: 6, kind: input, shape index: {}]
  %s7 = inlined_call_operand.vmem [shape: f32[8,1], index: 7, kind: output, shape index: {}]
  %s8 = sld [smem:[#allocation0]]
  $region46: #{tpu_custom_call.1} parent=0
    _
  %s10 = ssub.s32 1, %s8
  %s11 = scalar_select 0, %s10, %s8
  %v12 = vstv %s6
  %13 = vst [vmem:[#allocation2] sm:$0x1] %v12
  $region1: #{tpu_custom_call.1} parent=0
    #allocation3 [shape = 'u8[4096]{0}', space=vmem, size = 0x1000, scoped, tag = 'input window, operand 0, single buffered']
    #allocation4 [shape = 's32[1]{0}', space=sflag, size = 0x4, scoped, tag = 'scoped memory for tpu_custom_call.1']
    #allocation5 [shape = 'u8[512]{0}', space=vmem, size = 0x400, scoped, tag = 'input window, operand 2, single buffered']
    #allocation6 [shape = 's32[1]{0}', space=sflag, size = 0x4, scoped, tag = 'scoped memory for tpu_custom_call.1']
    %14 = vsyncpa [#allocation4], 0
    %15 = vsyncpa [#allocation6], 0
    // Predicated region
    $region2: #{tpu_custom_call.1} parent=1 // pred_check
      _
    $region3: #{tpu_custom_call.1} parent=1 // pred_check_branch
      %17 = sbr.rel (0) target = $region5
    $region4: #{tpu_custom_call.1} parent=1 // pred_region
      %s19 = ssub.s32 128, 128
      %20 = vsyncadd [#allocation4], %s19
      %s22 = sshll.u32 [#allocation3], 4
      %s23 = int_to_ptr.vmem [resolvable:$true] %s22
      %25 = dma.hbm_to_vmem [thread:$0]  %s0, 128, %s23, [#allocation4]
    $region5: #{tpu_custom_call.1} parent=1 // pred_fallthru
      _
    // Predicated region
    $region6: #{tpu_custom_call.1} parent=1 // pred_check
      _
    $region7: #{tpu_custom_call.1} parent=1 // pred_check_branch
      %27 = sbr.rel (0) target = $region9
    $region8: #{tpu_custom_call.1} parent=1 // pred_region
      _
    $region9: #{tpu_custom_call.1} parent=1 // pred_fallthru
      _
    // Predicated region
    $region10: #{tpu_custom_call.1} parent=1 // pred_check
      _
    $region11: #{tpu_custom_call.1} parent=1 // pred_check_branch
      %29 = sbr.rel (0) target = $region13
    $region12: #{tpu_custom_call.1} parent=1 // pred_region
      %s31 = ssub.s32 16, 16
      %32 = vsyncadd [#allocation6], %s31
      %s34 = sshll.u32 [#allocation5], 4
      %s35 = int_to_ptr.vmem [resolvable:$true] %s34
      %37 = dma.hbm_to_vmem [thread:$0]  %s2, 16, %s35, [#allocation6]
    $region13: #{tpu_custom_call.1} parent=1 // pred_fallthru
      _
    // Predicated region
    $region14: #{tpu_custom_call.1} parent=1 // pred_check
      _
    $region15: #{tpu_custom_call.1} parent=1 // pred_check_branch
      %39 = sbr.rel (0) target = $region17
    $region16: #{tpu_custom_call.1} parent=1 // pred_region
      _
    $region17: #{tpu_custom_call.1} parent=1 // pred_fallthru
      _
    // Predicated region
    $region18: #{tpu_custom_call.1} parent=1 // pred_check
      _
    $region19: #{tpu_custom_call.1} parent=1 // pred_check_branch
      %41 = sbr.rel (0) target = $region21
    $region20: #{tpu_custom_call.1} parent=1 // pred_region
      _
    $region21: #{tpu_custom_call.1} parent=1 // pred_fallthru
      _
    // Predicated region
    $region22: #{tpu_custom_call.1} parent=1 // pred_check
      _
    $region23: #{tpu_custom_call.1} parent=1 // pred_check_branch
      %43 = sbr.rel (0) target = $region25
    $region24: #{tpu_custom_call.1} parent=1 // pred_region
      _
    $region25: #{tpu_custom_call.1} parent=1 // pred_fallthru
      _
    // Predicated region
    $region26: #{tpu_custom_call.1} parent=1 // pred_check
      _
    $region27: #{tpu_custom_call.1} parent=1 // pred_check_branch
      %45 = sbr.rel (0) target = $region29
    $region28: #{tpu_custom_call.1} parent=1 // pred_region
      _
    $region29: #{tpu_custom_call.1} parent=1 // pred_fallthru
      _
    // Predicated region
    $region30: #{tpu_custom_call.1} parent=1 // pred_check
      _
    $region31: #{tpu_custom_call.1} parent=1 // pred_check_branch
      %47 = sbr.rel (0) target = $region33
    $region32: #{tpu_custom_call.1} parent=1 // pred_region
      %48 = dma.done [#allocation4], 128
    $region33: #{tpu_custom_call.1} parent=1 // pred_fallthru
      _
    // Predicated region
    $region34: #{tpu_custom_call.1} parent=1 // pred_check
      _
    $region35: #{tpu_custom_call.1} parent=1 // pred_check_branch
      %50 = sbr.rel (0) target = $region37
    $region36: #{tpu_custom_call.1} parent=1 // pred_region
      %51 = dma.done [#allocation6], 16
    $region37: #{tpu_custom_call.1} parent=1 // pred_fallthru
      _
    %v52 = vld [vmem:[#allocation3] sm:$0xff]
    %v53 = vld [vmem:[%s1] sm:$0xff]
    %v54 = vld [vmem:[%s1 + $0x8] sm:$0xff]
    %v55 = vld [vmem:[#allocation5] sm:$0x1]
    %v57 = vlaneseq
    %v58 = vshrl.u32 %v57, 7
    %v59 = vsub.s32 0, %v58
    %v60 = vrot.slane %v55, %v59
    %vm62 = vcmask 130048
    %v64 = vsel %vm62, %v52, 0
    %66 = vmatprep.subr.mxu0 0.0
    %67 = vmatpush1.msra.mxu0 %v53
    %68 = vmatprep.subr.mxu0 0.0
    %69 = vmatpush1.msra.mxu0 %v54
    %70 = vmatprep.subr.mxu0 0.0
    %71 = vmatpush1.msra.mxu0 0.0
    %72 = vmatprep.subr.mxu0 0.0
    %73 = vmatpush1.msra.mxu0 0.0
    %74 = vmatprep.subr.mxu0 0.0
    %75 = vmatpush1.msra.mxu0 0.0
    %76 = vmatprep.subr.mxu0 0.0
    %77 = vmatpush1.msra.mxu0 0.0
    %78 = vmatprep.subr.mxu0 0.0
    %79 = vmatpush1.msra.mxu0 0.0
    %80 = vmatprep.subr.mxu0 0.0
    %81 = vmatpush1.msra.mxu0 0.0
    %82 = vmatprep.subr.mxu0 0.0
    %83 = vmatpush1.msra.mxu0 0.0
    %84 = vmatprep.subr.mxu0 0.0
    %85 = vmatpush1.msra.mxu0 0.0
    %86 = vmatprep.subr.mxu0 0.0
    %87 = vmatpush1.msra.mxu0 0.0
    %88 = vmatprep.subr.mxu0 0.0
    %89 = vmatpush1.msra.mxu0 0.0
    %90 = vmatprep.subr.mxu0 0.0
    %91 = vmatpush1.msra.mxu0 0.0
    %92 = vmatprep.subr.mxu0 0.0
    %93 = vmatpush1.msra.mxu0 0.0
    %94 = vmatprep.subr.mxu0 0.0
    %95 = vmatpush1.msra.mxu0 0.0
    %96 = vmatprep.subr.mxu0 0.0
    %97 = vmatpush1.msra.mxu0 0.0
    %98 = vmatprep.subr.mxu0 0.0
    %99 = vmatpush1.msra.mxu0 0.0
    %100 = vmatprep.subr.mxu0 0.0
    %101 = vmatpush1.msra.mxu0 0.0
    %102 = vmatprep.subr.mxu0 0.0
    %103 = vmatpush1.msra.mxu0 0.0
    %104 = vmatprep.subr.mxu0 0.0
    %105 = vmatpush1.msra.mxu0 0.0
    %106 = vmatprep.subr.mxu0 0.0
    %107 = vmatpush1.msra.mxu0 0.0
    %108 = vmatprep.subr.mxu0 0.0
    %109 = vmatpush1.msra.mxu0 0.0
    %110 = vmatprep.subr.mxu0 0.0
    %111 = vmatpush1.msra.mxu0 0.0
    %112 = vmatprep.subr.mxu0 0.0
    %113 = vmatpush1.msra.mxu0 0.0
    %114 = vmatprep.subr.mxu0 0.0
    %115 = vmatpush1.msra.mxu0 0.0
    %116 = vmatprep.subr.mxu0 0.0
    %117 = vmatpush1.msra.mxu0 0.0
    %118 = vmatprep.subr.mxu0 0.0
    %119 = vmatpush1.msra.mxu0 0.0
    %120 = vmatprep.subr.mxu0 0.0
    %121 = vmatpush1.msra.mxu0 0.0
    %122 = vmatprep.subr.mxu0 0.0
    %123 = vmatpush1.msra.mxu0 0.0
    %124 = vmatprep.subr.mxu0 0.0
    %125 = vmatpush1.msra.mxu0 0.0
    %126 = vmatprep.subr.mxu0 0.0
    %127 = vmatpush1.msra.mxu0 0.0
    %128 = vmatprep.subr.mxu0 0.0
    %129 = vmatpush1.msra.mxu0 0.0
    %130 = vmatprep.mubr.f32.mxu0 0.0
    %131 = vmatmul.mubr.f32.gmra.mrb[0].mxu0 %v64
    %v132 = vpop.f32.mrb[0].mxu0
    %v133 = vadd.f32 %v60, %v132
    %v134 = vpop.f32.mrb[0].mxu0
    %135 = vdwg.mxu0
    %v136 = vld [vmem:[%s3] sm:$0xff]
    %v137 = vld [vmem:[%s3 + $0x8] sm:$0xff]
    %v138 = vld [vmem:[%s3 + $0x10] sm:$0xff]
    %v139 = vld [vmem:[%s3 + $0x18] sm:$0xff]
    %v140 = vld [vmem:[%s4] sm:$0x1]
    %v142 = vlaneseq
    %v143 = vshrl.u32 %v142, 7
    %v144 = vsub.s32 0, %v143
    %v145 = vrot.slane %v140, %v144
    %vm147 = vcmask 261120
    %v149 = vsel %vm147, %v133, 0
    %151 = vmatprep.subr.mxu0 0.0
    %152 = vmatpush1.msra.mxu0 %v136
    %153 = vmatprep.subr.mxu0 0.0
    %154 = vmatpush1.msra.mxu0 %v137
    %155 = vmatprep.subr.mxu0 0.0
    %156 = vmatpush1.msra.mxu0 %v138
    %157 = vmatprep.subr.mxu0 0.0
    %158 = vmatpush1.msra.mxu0 %v139
    %159 = vmatprep.subr.mxu0 0.0
    %160 = vmatpush1.msra.mxu0 0.0
    %161 = vmatprep.subr.mxu0 0.0
    %162 = vmatpush1.msra.mxu0 0.0
    %163 = vmatprep.subr.mxu0 0.0
    %164 = vmatpush1.msra.mxu0 0.0
    %165 = vmatprep.subr.mxu0 0.0
    %166 = vmatpush1.msra.mxu0 0.0
    %167 = vmatprep.subr.mxu0 0.0
    %168 = vmatpush1.msra.mxu0 0.0
    %169 = vmatprep.subr.mxu0 0.0
    %170 = vmatpush1.msra.mxu0 0.0
    %171 = vmatprep.subr.mxu0 0.0
    %172 = vmatpush1.msra.mxu0 0.0
    %173 = vmatprep.subr.mxu0 0.0
    %174 = vmatpush1.msra.mxu0 0.0
    %175 = vmatprep.subr.mxu0 0.0
    %176 = vmatpush1.msra.mxu0 0.0
    %177 = vmatprep.subr.mxu0 0.0
    %178 = vmatpush1.msra.mxu0 0.0
    %179 = vmatprep.subr.mxu0 0.0
    %180 = vmatpush1.msra.mxu0 0.0
    %181 = vmatprep.subr.mxu0 0.0
    %182 = vmatpush1.msra.mxu0 0.0
    %183 = vmatprep.subr.mxu0 0.0
    %184 = vmatpush1.msra.mxu0 0.0
    %185 = vmatprep.subr.mxu0 0.0
    %186 = vmatpush1.msra.mxu0 0.0
    %187 = vmatprep.subr.mxu0 0.0
    %188 = vmatpush1.msra.mxu0 0.0
    %189 = vmatprep.subr.mxu0 0.0
    %190 = vmatpush1.msra.mxu0 0.0
    %191 = vmatprep.subr.mxu0 0.0
    %192 = vmatpush1.msra.mxu0 0.0
    %193 = vmatprep.subr.mxu0 0.0
    %194 = vmatpush1.msra.mxu0 0.0
    %195 = vmatprep.subr.mxu0 0.0
    %196 = vmatpush1.msra.mxu0 0.0
    %197 = vmatprep.subr.mxu0 0.0
    %198 = vmatpush1.msra.mxu0 0.0
    %199 = vmatprep.subr.mxu0 0.0
    %200 = vmatpush1.msra.mxu0 0.0
    %201 = vmatprep.subr.mxu0 0.0
    %202 = vmatpush1.msra.mxu0 0.0
    %203 = vmatprep.subr.mxu0 0.0
    %204 = vmatpush1.msra.mxu0 0.0
    %205 = vmatprep.subr.mxu0 0.0
    %206 = vmatpush1.msra.mxu0 0.0
    %207 = vmatprep.subr.mxu0 0.0
    %208 = vmatpush1.msra.mxu0 0.0
    %209 = vmatprep.subr.mxu0 0.0
    %210 = vmatpush1.msra.mxu0 0.0
    %211 = vmatprep.subr.mxu0 0.0
    %212 = vmatpush1.msra.mxu0 0.0
    %213 = vmatprep.subr.mxu0 0.0
    %214 = vmatpush1.msra.mxu0 0.0
    %215 = vmatprep.mubr.f32.mxu0 0.0
    %216 = vmatmul.mubr.f32.gmra.mrb[0].mxu0 %v149
    %v217 = vpop.f32.mrb[0].mxu0
    %v218 = vadd.f32 %v145, %v217
    %v219 = vpop.f32.mrb[0].mxu0
    %220 = vdwg.mxu0
    %v221 = vmax.f32 %v218, 0.0
    %v222 = vld [vmem:[%s5] sm:$0xff]
    %v223 = vld [vmem:[%s5 + $0x8] sm:$0xff]
    %v224 = vld [vmem:[%s5 + $0x10] sm:$0xff]
    %v225 = vld [vmem:[%s5 + $0x18] sm:$0xff]
    %v226 = vld [vmem:[#allocation2] sm:$0x1]
    %v228 = vlaneseq
    %v229 = vshrl.u32 %v228, 7
    %v230 = vsub.s32 0, %v229
    %v231 = vrot.slane %v226, %v230
    %v234 = vsel %vm147, %v221, 0
    %236 = vmatprep.subr.mxu0 0.0
    %237 = vmatpush1.msra.mxu0 %v222
    %238 = vmatprep.subr.mxu0 0.0
    %239 = vmatpush1.msra.mxu0 %v223
    %240 = vmatprep.subr.mxu0 0.0
    %241 = vmatpush1.msra.mxu0 %v224
    %242 = vmatprep.subr.mxu0 0.0
    %243 = vmatpush1.msra.mxu0 %v225
    %244 = vmatprep.subr.mxu0 0.0
    %245 = vmatpush1.msra.mxu0 0.0
    %246 = vmatprep.subr.mxu0 0.0
    %247 = vmatpush1.msra.mxu0 0.0
    %248 = vmatprep.subr.mxu0 0.0
    %249 = vmatpush1.msra.mxu0 0.0
    %250 = vmatprep.subr.mxu0 0.0
    %251 = vmatpush1.msra.mxu0 0.0
    %252 = vmatprep.subr.mxu0 0.0
    %253 = vmatpush1.msra.mxu0 0.0
    %254 = vmatprep.subr.mxu0 0.0
    %255 = vmatpush1.msra.mxu0 0.0
    %256 = vmatprep.subr.mxu0 0.0
    %257 = vmatpush1.msra.mxu0 0.0
    %258 = vmatprep.subr.mxu0 0.0
    %259 = vmatpush1.msra.mxu0 0.0
    %260 = vmatprep.subr.mxu0 0.0
    %261 = vmatpush1.msra.mxu0 0.0
    %262 = vmatprep.subr.mxu0 0.0
    %263 = vmatpush1.msra.mxu0 0.0
    %264 = vmatprep.subr.mxu0 0.0
    %265 = vmatpush1.msra.mxu0 0.0
    %266 = vmatprep.subr.mxu0 0.0
    %267 = vmatpush1.msra.mxu0 0.0
    %268 = vmatprep.subr.mxu0 0.0
    %269 = vmatpush1.msra.mxu0 0.0
    %270 = vmatprep.subr.mxu0 0.0
    %271 = vmatpush1.msra.mxu0 0.0
    %272 = vmatprep.subr.mxu0 0.0
    %273 = vmatpush1.msra.mxu0 0.0
    %274 = vmatprep.subr.mxu0 0.0
    %275 = vmatpush1.msra.mxu0 0.0
    %276 = vmatprep.subr.mxu0 0.0
    %277 = vmatpush1.msra.mxu0 0.0
    %278 = vmatprep.subr.mxu0 0.0
    %279 = vmatpush1.msra.mxu0 0.0
    %280 = vmatprep.subr.mxu0 0.0
    %281 = vmatpush1.msra.mxu0 0.0
    %282 = vmatprep.subr.mxu0 0.0
    %283 = vmatpush1.msra.mxu0 0.0
    %284 = vmatprep.subr.mxu0 0.0
    %285 = vmatpush1.msra.mxu0 0.0
    %286 = vmatprep.subr.mxu0 0.0
    %287 = vmatpush1.msra.mxu0 0.0
    %288 = vmatprep.subr.mxu0 0.0
    %289 = vmatpush1.msra.mxu0 0.0
    %290 = vmatprep.subr.mxu0 0.0
    %291 = vmatpush1.msra.mxu0 0.0
    %292 = vmatprep.subr.mxu0 0.0
    %293 = vmatpush1.msra.mxu0 0.0
    %294 = vmatprep.subr.mxu0 0.0
    %295 = vmatpush1.msra.mxu0 0.0
    %296 = vmatprep.subr.mxu0 0.0
    %297 = vmatpush1.msra.mxu0 0.0
    %298 = vmatprep.subr.mxu0 0.0
    %299 = vmatpush1.msra.mxu0 0.0
    %300 = vmatprep.mubr.f32.mxu0 0.0
    %301 = vmatmul.mubr.f32.gmra.mrb[0].mxu0 %v234
    %v302 = vpop.f32.mrb[0].mxu0
    %v303 = vadd.f32 %v231, %v302
    %v304 = vpop.f32.mrb[0].mxu0
    %305 = vdwg.mxu0
    %vm306 = vcmask 7168
    %307 = vst.msk [vmem:[%s7] sm:$0xff] %vm306, %v303
    // Predicated region
    $region38: #{tpu_custom_call.1} parent=1 // pred_check
      _
    $region39: #{tpu_custom_call.1} parent=1 // pred_check_branch
      %309 = sbr.rel (0) target = $region41
    $region40: #{tpu_custom_call.1} parent=1 // pred_region
      _
    $region41: #{tpu_custom_call.1} parent=1 // pred_fallthru
      _
    // Predicated region
    $region42: #{tpu_custom_call.1} parent=1 // pred_check
      _
    $region43: #{tpu_custom_call.1} parent=1 // pred_check_branch
      %311 = sbr.rel (0) target = $region45
    $region44: #{tpu_custom_call.1} parent=1 // pred_region
      _
    $region45: #{tpu_custom_call.1} parent=1 // pred_fallthru
      _
    %312 = vsyncpa [#allocation4], 1
    %313 = vsyncpa [#allocation6], 1

</llo_original>
